<compile_context>
chip_gen: v5e
topology: v5e:2x2
jax: 0.10.0
libtpu: 0.0.40
codegen_flags: <defaults>
</compile_context>

<pallas_src>
import jax
import jax.numpy as jnp
from jax.experimental import pallas as pl
from jax.experimental.pallas import tpu as pltpu

_LANE = 128          # TPU lane width (last-dim register width)
_SMALL_K = 8         # contraction dims <= this use unrolled VPU FMAs, not MXU
_TILED_MIN_B = 512   # batches at/above this get the parallel grid path
_MIN_GRID_STEPS = 4  # >= 2 steps per TensorCore on v7x megacore


def _pgn_kernel(x_ref, w1_ref, b1_ref, w2_ref, b2_ref, out_ref):
    x = x_ref[...]
    w1 = w1_ref[...]
    b, in_dim = x.shape
    hidden = w1.shape[1]
    n_out = out_ref.shape[-1]   # real n_actions (output block is narrow)

    if in_dim <= _SMALL_K:
        # K is tiny (4 for CartPole): the MXU systolic array would be ~3%
        # utilized and we'd still pay its push/pop latency, so do the first
        # layer as `in_dim` unrolled broadcast-FMAs on the VPU.
        h = jnp.broadcast_to(b1_ref[...], (b, hidden))
        for k in range(in_dim):  # static unroll (in_dim is trace-time const)
            h = h + x[:, k:k + 1] * w1[k:k + 1, :]
    else:
        h = jnp.dot(x, w1, preferred_element_type=jnp.float32) + b1_ref[...]

    h = jnp.maximum(h, 0.0)  # ReLU on the VPU (f32 everywhere: v5e-safe)

    # Output layer on the MXU (K = hidden = 128).  w2/b2 are lane-padded at
    # init so the matmul operand is a clean (128, 128) tile; only the real
    # n_actions columns are stored (narrow HBM writeback, no padded slab).
    o = jnp.dot(h, w2_ref[...], preferred_element_type=jnp.float32) + b2_ref[...]
    out_ref[...] = o[:, :n_out].astype(out_ref.dtype)


def _pgn_single_block(x, w1, b1, w2p, b2p, n_actions):
    """Small-B path: one invocation, no grid, full-array VMEM blocks.
    Strips every piece of grid/pipelining machinery — at CartPole sizes the
    kernel is 100% fixed-overhead bound."""
    B = x.shape[0]
    vmem = pl.BlockSpec(memory_space=pltpu.MemorySpace.VMEM)
    return pl.pallas_call(
        _pgn_kernel,
        out_shape=jax.ShapeDtypeStruct((B, n_actions), jnp.float32),
        in_specs=[vmem, vmem, vmem, vmem, vmem],
        out_specs=vmem,
    )(x, w1, b1, w2p, b2p)


def _pgn_batch_tiled(x, w1, b1, w2p, b2p, n_actions, tb):
    """Large-B path: batch is a parallel grid axis so x/out tiles are
    double-buffered and megacore (v7x) shards the work; weights and biases map
    to the same block every step and stay VMEM-resident.  Output blocks are
    (tb, n_actions): the last dim equals the full array dim (legal), so no
    padded logits ever hit HBM."""
    B, in_dim = x.shape
    hidden = w1.shape[1]
    n_pad = w2p.shape[1]
    assert B % tb == 0, "caller pads B to a multiple of tb"
    return pl.pallas_call(
        _pgn_kernel,
        out_shape=jax.ShapeDtypeStruct((B, n_actions), jnp.float32),
        grid=(B // tb,),
        in_specs=[
            pl.BlockSpec((tb, in_dim), lambda i: (i, 0)),
            pl.BlockSpec((in_dim, hidden), lambda i: (0, 0)),
            pl.BlockSpec((1, hidden), lambda i: (0, 0)),
            pl.BlockSpec((hidden, n_pad), lambda i: (0, 0)),
            pl.BlockSpec((1, n_pad), lambda i: (0, 0)),
        ],
        out_specs=pl.BlockSpec((tb, n_actions), lambda i: (i, 0)),
        compiler_params=pltpu.CompilerParams(
            dimension_semantics=("parallel",)),
    )(x, w1, b1, w2p, b2p)


def _pick_batch_tile(B):
    """Largest tile (multiple of 128, capped at 2048) that still leaves at
    least _MIN_GRID_STEPS grid steps.  Per-step overhead is ~0.35 us, so big
    tiles win on v5e/v6e; keeping >= 4 steps keeps both v7x TCs busy.  VMEM is
    never the binding constraint at these sizes."""
    tb = (B // _MIN_GRID_STEPS) // 128 * 128
    return max(128, min(2048, tb))


def pad_output_head(w2, b2):
    """Lane-pad the (hidden, n_actions) head to a multiple of 128 ONCE (at
    init) so the kernel's second matmul operand is lane-dense.  Padded columns
    are exactly zero and are never stored to HBM."""
    n_actions = w2.shape[1]
    n_pad = _LANE * pl.cdiv(n_actions, _LANE)
    if n_pad != n_actions:
        w2 = jnp.pad(w2, ((0, 0), (0, n_pad - n_actions)))
        b2 = jnp.pad(b2, ((0, 0), (0, n_pad - n_actions)))
    return w2, b2


def pgn_forward(x, w1, b1, w2p, b2p, n_actions):
    """Forward pass of PGN. x: [B, input_size] -> logits [B, n_actions].
    w2p/b2p are the lane-padded head produced by init_pgn_params."""
    B = x.shape[0]

    if B >= _TILED_MIN_B:
        tb = _pick_batch_tile(B)
        Bp = tb * pl.cdiv(B, tb)
        x_run = x if Bp == B else jnp.pad(x, ((0, Bp - B), (0, 0)))
        out = _pgn_batch_tiled(x_run, w1, b1, w2p, b2p, n_actions, tb)
        return out if Bp == B else out[:B]

    return _pgn_single_block(x, w1, b1, w2p, b2p, n_actions)


def init_pgn_params(key, input_size, n_actions, hidden=128):
    """PyTorch nn.Linear-style init: U(-1/sqrt(fan_in), +1/sqrt(fan_in)).
    Returns (w1, b1, w2_padded, b2_padded) — head padding is done here, once,
    so the hot path never pays for it."""
    k1, k2, k3, k4 = jax.random.split(key, 4)
    bound1 = 1.0 / jnp.sqrt(jnp.float32(input_size))
    bound2 = 1.0 / jnp.sqrt(jnp.float32(hidden))
    w1 = jax.random.uniform(k1, (input_size, hidden), jnp.float32, -bound1, bound1)
    b1 = jax.random.uniform(k2, (1, hidden), jnp.float32, -bound1, bound1)
    w2 = jax.random.uniform(k3, (hidden, n_actions), jnp.float32, -bound2, bound2)
    b2 = jax.random.uniform(k4, (1, n_actions), jnp.float32, -bound2, bound2)
    w2p, b2p = pad_output_head(w2, b2)
    return w1, b1, w2p, b2p


def pgn_reference(x, w1, b1, w2, b2):
    h = jnp.maximum(x @ w1 + b1, 0.0)
    return h @ w2 + b2


if __name__ == "__main__":
    # CartPole-v0: observation dim = 4, actions = 2.
    input_size, n_actions, batch = 4, 2, 8

    key = jax.random.PRNGKey(0)
    kx, kp, kx_big = jax.random.split(key, 3)
    x = jax.random.normal(kx, (batch, input_size), jnp.float32)
    w1, b1, w2p, b2p = init_pgn_params(kp, input_size, n_actions)

    # Small-batch (no-grid, single-block) path.
    out = jax.block_until_ready(pgn_forward(x, w1, b1, w2p, b2p, n_actions))
    ref = pgn_reference(x, w1, b1, w2p, b2p)[:, :n_actions]  # padded cols are 0
    assert out.shape == (batch, n_actions)
    assert jnp.allclose(out, ref, atol=1e-5, rtol=1e-5), "mismatch vs reference (small B)"

    # Large-batch (parallel batch-tiled grid) path, with a non-tile-multiple B
    # to exercise the pad-and-slice remainder handling.
    big_b = 600
    xb = jax.random.normal(kx_big, (big_b, input_size), jnp.float32)
    outb = jax.block_until_ready(pgn_forward(xb, w1, b1, w2p, b2p, n_actions))
    refb = pgn_reference(xb, w1, b1, w2p, b2p)[:, :n_actions]
    assert outb.shape == (big_b, n_actions)
    assert jnp.allclose(outb, refb, atol=1e-5, rtol=1e-5), "mismatch vs reference (large B)"

    print("KERNEL_OK")
</pallas_src>

<mosaic_0001>
module attributes {stable_mosaic.version = 11 : i64} {
  func.func @_pgn_kernel(%arg0: memref<8x4xf32, #tpu.memory_space<vmem>>, %arg1: memref<4x128xf32, #tpu.memory_space<vmem>>, %arg2: memref<1x128xf32, #tpu.memory_space<vmem>>, %arg3: memref<128x128xf32, #tpu.memory_space<vmem>>, %arg4: memref<1x128xf32, #tpu.memory_space<vmem>>, %arg5: memref<8x2xf32, #tpu.memory_space<vmem>>) attributes {dimension_semantics = [], scalar_prefetch = 0 : i64, scratch_operands = 0 : i64, tpu.core_type = #tpu.core_type<tc>} {
    %c0 = arith.constant 0 : index
    %c0_0 = arith.constant 0 : index
    %0 = vector.load %arg0[%c0, %c0_0] : memref<8x4xf32, #tpu.memory_space<vmem>>, vector<8x4xf32>
    %c0_1 = arith.constant 0 : index
    %c0_2 = arith.constant 0 : index
    %1 = vector.load %arg1[%c0_1, %c0_2] : memref<4x128xf32, #tpu.memory_space<vmem>>, vector<4x128xf32>
    %c0_3 = arith.constant 0 : index
    %c0_4 = arith.constant 0 : index
    %2 = vector.load %arg2[%c0_3, %c0_4] : memref<1x128xf32, #tpu.memory_space<vmem>>, vector<1x128xf32>
    %3 = vector.shape_cast %2 : vector<1x128xf32> to vector<1x128xf32>
    %4 = vector.broadcast %3 : vector<1x128xf32> to vector<8x128xf32>
    %5 = vector.extract_strided_slice %0 {offsets = [0, 0], sizes = [8, 1], strides = [1, 1]} : vector<8x4xf32> to vector<8x1xf32>
    %6 = vector.extract_strided_slice %1 {offsets = [0, 0], sizes = [1, 128], strides = [1, 1]} : vector<4x128xf32> to vector<1x128xf32>
    %7 = vector.broadcast %5 : vector<8x1xf32> to vector<8x128xf32>
    %8 = vector.broadcast %6 : vector<1x128xf32> to vector<8x128xf32>
    %9 = arith.mulf %7, %8 : vector<8x128xf32>
    %10 = arith.addf %4, %9 : vector<8x128xf32>
    %11 = vector.extract_strided_slice %0 {offsets = [0, 1], sizes = [8, 1], strides = [1, 1]} : vector<8x4xf32> to vector<8x1xf32>
    %12 = vector.extract_strided_slice %1 {offsets = [1, 0], sizes = [1, 128], strides = [1, 1]} : vector<4x128xf32> to vector<1x128xf32>
    %13 = vector.broadcast %11 : vector<8x1xf32> to vector<8x128xf32>
    %14 = vector.broadcast %12 : vector<1x128xf32> to vector<8x128xf32>
    %15 = arith.mulf %13, %14 : vector<8x128xf32>
    %16 = arith.addf %10, %15 : vector<8x128xf32>
    %17 = vector.extract_strided_slice %0 {offsets = [0, 2], sizes = [8, 1], strides = [1, 1]} : vector<8x4xf32> to vector<8x1xf32>
    %18 = vector.extract_strided_slice %1 {offsets = [2, 0], sizes = [1, 128], strides = [1, 1]} : vector<4x128xf32> to vector<1x128xf32>
    %19 = vector.broadcast %17 : vector<8x1xf32> to vector<8x128xf32>
    %20 = vector.broadcast %18 : vector<1x128xf32> to vector<8x128xf32>
    %21 = arith.mulf %19, %20 : vector<8x128xf32>
    %22 = arith.addf %16, %21 : vector<8x128xf32>
    %23 = vector.extract_strided_slice %0 {offsets = [0, 3], sizes = [8, 1], strides = [1, 1]} : vector<8x4xf32> to vector<8x1xf32>
    %24 = vector.extract_strided_slice %1 {offsets = [3, 0], sizes = [1, 128], strides = [1, 1]} : vector<4x128xf32> to vector<1x128xf32>
    %25 = vector.broadcast %23 : vector<8x1xf32> to vector<8x128xf32>
    %26 = vector.broadcast %24 : vector<1x128xf32> to vector<8x128xf32>
    %27 = arith.mulf %25, %26 : vector<8x128xf32>
    %28 = arith.addf %22, %27 : vector<8x128xf32>
    %cst = arith.constant 0.000000e+00 : f32
    %29 = vector.broadcast %cst : f32 to vector<8x128xf32>
    %30 = arith.maximumf %28, %29 : vector<8x128xf32>
    %c0_5 = arith.constant 0 : index
    %c0_6 = arith.constant 0 : index
    %31 = vector.load %arg3[%c0_5, %c0_6] : memref<128x128xf32, #tpu.memory_space<vmem>>, vector<128x128xf32>
    %cst_7 = arith.constant dense<0.000000e+00> : vector<8x128xf32>
    %32 = tpu.matmul %30, %31, %cst_7 {dimension_numbers = #tpu.dot_dimension_numbers<[1], [0], [0], [1], [0, 0, 1, 1], [], []>} : vector<8x128xf32>, vector<128x128xf32>, vector<8x128xf32> -> vector<8x128xf32>
    %c0_8 = arith.constant 0 : index
    %c0_9 = arith.constant 0 : index
    %33 = vector.load %arg4[%c0_8, %c0_9] : memref<1x128xf32, #tpu.memory_space<vmem>>, vector<1x128xf32>
    %34 = vector.broadcast %33 : vector<1x128xf32> to vector<8x128xf32>
    %35 = arith.addf %32, %34 : vector<8x128xf32>
    %36 = vector.extract_strided_slice %35 {offsets = [0, 0], sizes = [8, 2], strides = [1, 1]} : vector<8x128xf32> to vector<8x2xf32>
    %c0_10 = arith.constant 0 : index
    %c0_11 = arith.constant 0 : index
    %37 = vector.load %arg5[%c0_10, %c0_11] : memref<8x2xf32, #tpu.memory_space<vmem>>, vector<8x2xf32>
    tpu.vector_store %arg5[%c0_10, %c0_11], %36 {strides = array<i32>} : memref<8x2xf32, #tpu.memory_space<vmem>>, vector<8x2xf32>,
    return
  }
}

</mosaic_0001>

<llo_original>
// kernel: tpu_custom_call.1
$region0: #{tpu_custom_call.1}
  #allocation0 [shape = 'u32[]', space=smem, size = 0x4, offset = 0x4, fixed_abs, tag = 'smem constant byte address 0x4 - core index']
  #allocation1 [shape = 'u32[72,128]{1,0:T(1,128)}', space=vmem, size = 0x9000, scoped, tag = 'internal scratch']
  %s0 = inlined_call_operand.vmem [shape: f32[8,4], index: 0, kind: input, shape index: {}]
  %s1 = inlined_call_operand.vmem [shape: f32[4,128], index: 1, kind: input, shape index: {}]
  %s2 = inlined_call_operand.vmem [shape: f32[1,128], index: 2, kind: input, shape index: {}]
  %s3 = inlined_call_operand.hbm [shape: f32[128,128], index: 3, kind: input, shape index: {}]
  %s4 = inlined_call_operand.vmem [shape: f32[1,128], index: 4, kind: input, shape index: {}]
  %s5 = inlined_call_operand.vmem [shape: f32[8,2], index: 5, kind: output, shape index: {}]
  %s6 = sld [smem:[#allocation0]]
  $region34: #{tpu_custom_call.1} parent=0
    _
  %s8 = ssub.s32 1, %s6
  %s9 = scalar_select 0, %s8, %s6
  $region1: #{tpu_custom_call.1} parent=0
    #allocation2 [shape = 'u8[65536]{0}', space=vmem, size = 0x10000, scoped, tag = 'input window, operand 3, single buffered']
    #allocation3 [shape = 's32[1]{0}', space=sflag, size = 0x4, scoped, tag = 'scoped memory for tpu_custom_call.1']
    %10 = vsyncpa [#allocation3], 0
    // Predicated region
    $region2: #{tpu_custom_call.1} parent=1 // pred_check
      _
    $region3: #{tpu_custom_call.1} parent=1 // pred_check_branch
      %12 = sbr.rel (0) target = $region5
    $region4: #{tpu_custom_call.1} parent=1 // pred_region
      _
    $region5: #{tpu_custom_call.1} parent=1 // pred_fallthru
      _
    // Predicated region
    $region6: #{tpu_custom_call.1} parent=1 // pred_check
      _
    $region7: #{tpu_custom_call.1} parent=1 // pred_check_branch
      %14 = sbr.rel (0) target = $region9
    $region8: #{tpu_custom_call.1} parent=1 // pred_region
      _
    $region9: #{tpu_custom_call.1} parent=1 // pred_fallthru
      _
    // Predicated region
    $region10: #{tpu_custom_call.1} parent=1 // pred_check
      _
    $region11: #{tpu_custom_call.1} parent=1 // pred_check_branch
      %16 = sbr.rel (0) target = $region13
    $region12: #{tpu_custom_call.1} parent=1 // pred_region
      _
    $region13: #{tpu_custom_call.1} parent=1 // pred_fallthru
      _
    // Predicated region
    $region14: #{tpu_custom_call.1} parent=1 // pred_check
      _
    $region15: #{tpu_custom_call.1} parent=1 // pred_check_branch
      %18 = sbr.rel (0) target = $region17
    $region16: #{tpu_custom_call.1} parent=1 // pred_region
      %20 = vsyncadd [#allocation3], 0
      %s21 = sshll.u32 %s3, 4
      %s22 = int_to_ptr.hbm [resolvable:$true] %s21
      %s23 = sshll.u32 [#allocation2], 4
      %s24 = int_to_ptr.vmem [resolvable:$true] %s23
      %29 = dma.hbm_to_vmem [thread:$0]  %s22, 2048, %s24, [#allocation3], 128, 128, 8
    $region17: #{tpu_custom_call.1} parent=1 // pred_fallthru
      _
    // Predicated region
    $region18: #{tpu_custom_call.1} parent=1 // pred_check
      _
    $region19: #{tpu_custom_call.1} parent=1 // pred_check_branch
      %31 = sbr.rel (0) target = $region21
    $region20: #{tpu_custom_call.1} parent=1 // pred_region
      _
    $region21: #{tpu_custom_call.1} parent=1 // pred_fallthru
      _
    // Predicated region
    $region22: #{tpu_custom_call.1} parent=1 // pred_check
      _
    $region23: #{tpu_custom_call.1} parent=1 // pred_check_branch
      %33 = sbr.rel (0) target = $region25
    $region24: #{tpu_custom_call.1} parent=1 // pred_region
      %35 = dma.done [#allocation3], 2048
    $region25: #{tpu_custom_call.1} parent=1 // pred_fallthru
      _
    %v36 = vld [vmem:[%s0] sm:$0xff]
    %v37 = vld [vmem:[%s1] sm:$0xf]
    %v38 = vld [vmem:[%s2] sm:$0x1]
    %v40 = vperm.slane %v38, 0
    %43 = vset.pattern.permute.xlu0 0
    %44 = vperm.xlu0 %43, %v36
    %v45 = vpop.permute.xlu0 %44
    %v47 = vperm.slane %v37, 0
    %v48 = vmul.f32 %v45, %v47
    %v49 = vadd.f32 %v40, %v48
    %50 = vset.pattern.permute.xlu0 1
    %51 = vperm.xlu0 %50, %v36
    %v52 = vpop.permute.xlu0 %51
    %v54 = vperm.slane %v37, 1
    %v55 = vmul.f32 %v52, %v54
    %v56 = vadd.f32 %v49, %v55
    %57 = vset.pattern.permute.xlu0 2
    %58 = vperm.xlu0 %57, %v36
    %v59 = vpop.permute.xlu0 %58
    %v61 = vperm.slane %v37, 2
    %v62 = vmul.f32 %v59, %v61
    %v63 = vadd.f32 %v56, %v62
    %64 = vset.pattern.permute.xlu0 3
    %65 = vperm.xlu0 %64, %v36
    %v66 = vpop.permute.xlu0 %65
    %v68 = vperm.slane %v37, 3
    %v69 = vmul.f32 %v66, %v68
    %v70 = vadd.f32 %v63, %v69
    %v71 = vmax.f32 %v70, 0.0
    %v72 = vld [vmem:[#allocation2] sm:$0xff]
    %v73 = vld [vmem:[#allocation2 + $0x8] sm:$0xff]
    %v74 = vld [vmem:[#allocation2 + $0x10] sm:$0xff]
    %v75 = vld [vmem:[#allocation2 + $0x18] sm:$0xff]
    %v76 = vld [vmem:[#allocation2 + $0x20] sm:$0xff]
    %v77 = vld [vmem:[#allocation2 + $0x28] sm:$0xff]
    %v78 = vld [vmem:[#allocation2 + $0x30] sm:$0xff]
    %v79 = vld [vmem:[#allocation2 + $0x38] sm:$0xff]
    %v80 = vld [vmem:[#allocation2 + $0x40] sm:$0xff]
    %v81 = vld [vmem:[#allocation2 + $0x48] sm:$0xff]
    %v82 = vld [vmem:[#allocation2 + $0x50] sm:$0xff]
    %v83 = vld [vmem:[#allocation2 + $0x58] sm:$0xff]
    %v84 = vld [vmem:[#allocation2 + $0x60] sm:$0xff]
    %v85 = vld [vmem:[#allocation2 + $0x68] sm:$0xff]
    %v86 = vld [vmem:[#allocation2 + $0x70] sm:$0xff]
    %v87 = vld [vmem:[#allocation2 + $0x78] sm:$0xff]
    %v88 = vld [vmem:[%s4] sm:$0x1]
    %v90 = vperm.slane %v88, 0
    %92 = vmatpush.msra.mxu0 %v87
    %93 = vmatpush.msra.mxu0 %v86
    %94 = vmatpush.msra.mxu0 %v85
    %95 = vmatpush.msra.mxu0 %v84
    %96 = vmatpush.msra.mxu0 %v83
    %97 = vmatpush.msra.mxu0 %v82
    %98 = vmatpush.msra.mxu0 %v81
    %99 = vmatpush.msra.mxu0 %v80
    %100 = vmatpush.msra.mxu0 %v79
    %101 = vmatpush.msra.mxu0 %v78
    %102 = vmatpush.msra.mxu0 %v77
    %103 = vmatpush.msra.mxu0 %v76
    %104 = vmatpush.msra.mxu0 %v75
    %105 = vmatpush.msra.mxu0 %v74
    %106 = vmatpush.msra.mxu0 %v73
    %107 = vmatpush.msra.mxu0 %v72
    %108 = vmatmul.f32.gmra.mxu0 %v71
    %v109 = vpop.f32.mrf.mxu0
    %v110 = vadd.f32 %v90, %v109
    %111 = vdwg.mxu0
    %vm112 = vcmask 15360
    %113 = vst.msk [vmem:[%s5] sm:$0xff] %vm112, %v110
    // Predicated region
    $region26: #{tpu_custom_call.1} parent=1 // pred_check
      _
    $region27: #{tpu_custom_call.1} parent=1 // pred_check_branch
      %115 = sbr.rel (0) target = $region29
    $region28: #{tpu_custom_call.1} parent=1 // pred_region
      _
    $region29: #{tpu_custom_call.1} parent=1 // pred_fallthru
      _
    // Predicated region
    $region30: #{tpu_custom_call.1} parent=1 // pred_check
      _
    $region31: #{tpu_custom_call.1} parent=1 // pred_check_branch
      %117 = sbr.rel (0) target = $region33
    $region32: #{tpu_custom_call.1} parent=1 // pred_region
      _
    $region33: #{tpu_custom_call.1} parent=1 // pred_fallthru
      _
    %118 = vsyncpa [#allocation3], 1

</llo_original>
